<compile_context>
chip_gen: v7x
topology: tpu7x:2x2x1
jax: 0.10.0
libtpu: 0.0.40
codegen_flags: <defaults>
</compile_context>

<pallas_src>
import math

import jax
import jax.numpy as jnp
from jax.experimental import pallas as pl
from jax.experimental.pallas import tpu as pltpu

_LANE = 128


def _round_up(x: int, m: int) -> int:
    return ((x + m - 1) // m) * m


def _largest_tile(dim_pad: int, cap: int) -> int:
    """Largest multiple of 128 that divides dim_pad and is <= cap."""
    units = dim_pad // _LANE
    best = 1
    for d in range(1, units + 1):
        if units % d == 0 and d * _LANE <= cap:
            best = d
    return best * _LANE


def _vmem_capacity_bytes() -> int:
    try:
        return int(pltpu.get_tpu_info().vmem_capacity_bytes)
    except Exception:
        return 64 * 1024 * 1024  # conservative fallback (v7x per-TC VMEM)


def _choose_tiles(B_pad, K_pad, N_pad, itemsize, budget):
    """Pick (tk, tn) as divisors of the padded dims, as large as the budget allows."""
    x_resident = (2 * B_pad * K_pad * itemsize) <= min(4 << 20, budget // 8)
    tk_cap, tn_cap = 8192, 2048
    while True:
        tk = _largest_tile(K_pad, tk_cap)
        tn = _largest_tile(N_pad, tn_cap)
        w_bytes = 2 * tk * tn * itemsize                    # double-buffered weight stream
        x_bytes = (2 * B_pad * K_pad * itemsize) if x_resident else (2 * B_pad * tk * itemsize)
        b_bytes = 2 * tn * 4
        o_bytes = 2 * B_pad * tn * 4
        total = w_bytes + x_bytes + b_bytes + o_bytes
        if total <= budget or (tk_cap <= _LANE and tn_cap <= _LANE):
            return tk, tn, x_resident, total
        if tk_cap >= 2 * tn_cap:
            tk_cap //= 2
        else:
            tn_cap //= 2


def _make_linear_kernel(x_resident: bool, tk: int):
    def kernel(x_ref, w_ref, b_ref, o_ref):
        k = pl.program_id(1)

        @pl.when(k == 0)
        def _():
            # Fold the bias in at init; accumulate directly into the f32 output
            # block (resident across the K axis) -- no scratch accumulator.
            o_ref[...] = jnp.broadcast_to(b_ref[...], o_ref.shape)

        if x_resident:
            xk = x_ref[:, pl.ds(pl.multiple_of(k * tk, tk), tk)]
        else:
            xk = x_ref[...]
        o_ref[...] += jnp.dot(xk, w_ref[...], preferred_element_type=jnp.float32)

    return kernel


def prepare_params(weight_t, bias, *, compute_dtype=jnp.bfloat16):
    """Pad + cast the Linear parameters ONCE (hoisted out of the per-call path).

    weight_t: (K, N) pre-transposed torch Linear weight.
    bias:     (N,)
    """
    K, N = weight_t.shape
    assert bias.shape == (N,)
    K_pad = _round_up(K, _LANE)
    N_pad = _round_up(N, _LANE)
    w_p = jnp.pad(weight_t, ((0, K_pad - K), (0, N_pad - N))).astype(compute_dtype)
    b_p = jnp.pad(bias, (0, N_pad - N)).reshape(1, N_pad).astype(jnp.float32)
    return {
        "weight": w_p, "bias": b_p,
        "K": K, "N": N, "K_pad": K_pad, "N_pad": N_pad,
        "compute_dtype": compute_dtype,
    }


def quadratic_cross_attention_forward(input_, other, params, *, sequence_length,
                                      output_features):
    """Pallas implementation of QuadraticCrossAttentionModule.forward.

    input_: (B, sequence_length, input_features)   -- shape checks only
    other:  (B, sequence_length_other, other_features)
    params: output of prepare_params (pre-padded bf16 weight + f32 bias)
    returns (B, sequence_length, output_features), float32
    """
    B, s_in, _f_in = input_.shape
    assert B == other.shape[0]
    assert s_in == sequence_length
    _, s_other, f_other = other.shape

    K, N = params["K"], params["N"]
    K_pad, N_pad = params["K_pad"], params["N_pad"]
    assert s_other * f_other == K
    assert output_features * sequence_length == N

    compute_dtype = params["compute_dtype"]
    itemsize = jnp.dtype(compute_dtype).itemsize

    # Sublane padding for the output rows / MXU M dimension.
    row_mult = 16 if itemsize == 2 else 8
    B_pad = _round_up(max(B, row_mult), row_mult)

    # Generation-aware tile sizing against ~70% of this chip's VMEM.
    vmem_cap = _vmem_capacity_bytes()
    budget = int(0.70 * vmem_cap)
    tk, tn, x_resident, step_bytes = _choose_tiles(B_pad, K_pad, N_pad, itemsize, budget)
    n_tiles = N_pad // tn
    k_tiles = K_pad // tk

    # Activation: reshape + pad + cast per call (small; weights were prepped once).
    x = other.reshape(B, K)
    x_p = jnp.pad(x, ((0, B_pad - B), (0, K_pad - K))).astype(compute_dtype)

    if x_resident:
        x_spec = pl.BlockSpec((B_pad, K_pad), lambda j, k: (0, 0))  # single DMA, resident
    else:
        x_spec = pl.BlockSpec((B_pad, tk), lambda j, k: (0, k))

    # Deepen the weight DMA pipeline only when tiles are forced small.
    w_tile_bytes = tk * tn * itemsize
    if n_tiles * k_tiles >= 4 and w_tile_bytes < (2 << 20):
        w_spec = pl.BlockSpec((tk, tn), lambda j, k: (k, j), pipeline_mode=pl.Buffered(3))
    else:
        w_spec = pl.BlockSpec((tk, tn), lambda j, k: (k, j))

    vmem_limit = int(min(int(0.9 * vmem_cap), max(16 * 1024 * 1024, 2 * step_bytes)))

    cost = pl.CostEstimate(
        flops=2 * B_pad * K_pad * N_pad,
        transcendentals=0,
        bytes_accessed=(B_pad * K_pad * itemsize
                        + K_pad * N_pad * itemsize
                        + B_pad * N_pad * 4),
    )

    # TODO(synk): v7x megacore split-K (leading grid axis of 2 with partial-sum
    # outputs) when n_tiles == 1 and K is large; left out to keep one code path.
    out_padded = pl.pallas_call(
        _make_linear_kernel(x_resident, tk),
        out_shape=jax.ShapeDtypeStruct((B_pad, N_pad), jnp.float32),
        grid_spec=pltpu.PrefetchScalarGridSpec(
            num_scalar_prefetch=0,
            grid=(n_tiles, k_tiles),
            in_specs=[
                x_spec,                                        # activations
                w_spec,                                        # streamed weight
                pl.BlockSpec((1, tn), lambda j, k: (0, j)),    # bias
            ],
            out_specs=pl.BlockSpec((B_pad, tn), lambda j, k: (0, j)),
        ),
        compiler_params=pltpu.CompilerParams(
            dimension_semantics=("parallel", "arbitrary"),
            vmem_limit_bytes=vmem_limit,
        ),
        cost_estimate=cost,
    )(x_p, params["weight"], params["bias"])

    out = out_padded[:B, :N].reshape(B, sequence_length, output_features)
    assert out.shape == (B, sequence_length, output_features)
    return out


def init_params(key, *, other_features, output_features, sequence_length,
                sequence_length_other):
    """Deterministic torch.nn.Linear-style init (uniform +-1/sqrt(fan_in))."""
    K = sequence_length_other * other_features
    N = output_features * sequence_length
    bound = 1.0 / math.sqrt(K)
    kw, kb = jax.random.split(key)
    # torch Linear stores weight as (N, K); we keep it pre-transposed (K, N).
    weight_t = jax.random.uniform(kw, (K, N), jnp.float32, -bound, bound)
    bias = jax.random.uniform(kb, (N,), jnp.float32, -bound, bound)
    return weight_t, bias


if __name__ == "__main__":
    # Small shapes consistent with the module's forward.
    B = 2
    input_features = 4
    other_features = 4
    output_features = 8
    sequence_length = 8
    sequence_length_other = 8

    key = jax.random.PRNGKey(0)
    k_in, k_other, k_params = jax.random.split(key, 3)

    input_ = jax.random.normal(k_in, (B, sequence_length, input_features), jnp.float32)
    other = jax.random.normal(
        k_other, (B, sequence_length_other, other_features), jnp.float32
    )

    weight_t, bias = init_params(
        k_params,
        other_features=other_features,
        output_features=output_features,
        sequence_length=sequence_length,
        sequence_length_other=sequence_length_other,
    )
    params = prepare_params(weight_t, bias)  # pad + cast ONCE, reused every call

    out = quadratic_cross_attention_forward(
        input_, other, params,
        sequence_length=sequence_length, output_features=output_features,
    )
    out = jax.block_until_ready(out)

    # References (pure JAX) mirroring the torch forward.
    x = other.reshape(B, -1)
    ref_f32 = (x @ weight_t + bias).reshape(B, sequence_length, output_features)
    # bf16-rounded-operand reference (matches kernel's compute dtype).
    xb = x.astype(jnp.bfloat16).astype(jnp.float32)
    wb = weight_t.astype(jnp.bfloat16).astype(jnp.float32)
    ref_bf16 = (
        jnp.dot(xb, wb, precision=jax.lax.Precision.HIGHEST) + bias
    ).reshape(B, sequence_length, output_features)

    assert out.shape == (B, sequence_length, output_features)
    assert not bool(jnp.isnan(out).any())
    assert bool(jnp.allclose(out, ref_bf16, atol=1e-3, rtol=1e-3))
    assert bool(jnp.allclose(out, ref_f32, atol=3e-2, rtol=3e-2))

    print("KERNEL_OK")
</pallas_src>

<mosaic_0001>
module attributes {stable_mosaic.version = 11 : i64} {
  func.func @kernel(%arg0: i32, %arg1: i32, %arg2: memref<16x128xbf16, #tpu.memory_space<vmem>>, %arg3: memref<128x128xbf16, #tpu.memory_space<vmem>>, %arg4: memref<1x128xf32, #tpu.memory_space<vmem>>, %arg5: memref<16x128xf32, #tpu.memory_space<vmem>>) attributes {dimension_semantics = [#tpu.dimension_semantics<parallel>, #tpu.dimension_semantics<arbitrary>], iteration_bounds = array<i64: 1, 1>, scalar_prefetch = 0 : i64, scratch_operands = 0 : i64, tpu.core_type = #tpu.core_type<tc>, window_params = [{pipeline_mode = #tpu.pipeline_mode<synchronous>, transform_indices = @transform_0, window_bounds = array<i64: 16, 128>}, {transform_indices = @transform_1, window_bounds = array<i64: 128, 128>}, {transform_indices = @transform_2, window_bounds = array<i64: 1, 128>}, {transform_indices = @transform_3, window_bounds = array<i64: 16, 128>}]} {
    %c0_i32 = arith.constant 0 : i32
    %0 = arith.cmpi eq, %arg1, %c0_i32 : i32
    %1 = arith.extui %0 : i1 to i32
    %c0_i32_0 = arith.constant 0 : i32
    %2 = arith.cmpi ne, %1, %c0_i32_0 : i32
    scf.if %2 {
      %c0_7 = arith.constant 0 : index
      %c0_8 = arith.constant 0 : index
      %12 = vector.load %arg4[%c0_7, %c0_8] : memref<1x128xf32, #tpu.memory_space<vmem>>, vector<1x128xf32>
      %13 = vector.shape_cast %12 : vector<1x128xf32> to vector<1x128xf32>
      %14 = vector.broadcast %13 : vector<1x128xf32> to vector<16x128xf32>
      %c0_9 = arith.constant 0 : index
      %c0_10 = arith.constant 0 : index
      %15 = vector.load %arg5[%c0_9, %c0_10] : memref<16x128xf32, #tpu.memory_space<vmem>>, vector<16x128xf32>
      tpu.vector_store %arg5[%c0_9, %c0_10], %14 {strides = array<i32>} : memref<16x128xf32, #tpu.memory_space<vmem>>, vector<16x128xf32>,
    } else {
    }
    %c128_i32 = arith.constant 128 : i32
    %3 = arith.muli %arg1, %c128_i32 : i32
    %4 = tpu.assume_multiple %3, 128 : i32
    %c0 = arith.constant 0 : index
    %5 = arith.index_cast %4 : i32 to index
    %6 = vector.load %arg2[%c0, %5] : memref<16x128xbf16, #tpu.memory_space<vmem>>, vector<16x128xbf16>
    %c0_1 = arith.constant 0 : index
    %c0_2 = arith.constant 0 : index
    %7 = vector.load %arg5[%c0_1, %c0_2] : memref<16x128xf32, #tpu.memory_space<vmem>>, vector<16x128xf32>
    %c0_3 = arith.constant 0 : index
    %c0_4 = arith.constant 0 : index
    %8 = vector.load %arg3[%c0_3, %c0_4] : memref<128x128xbf16, #tpu.memory_space<vmem>>, vector<128x128xbf16>
    %cst = arith.constant dense<0.000000e+00> : vector<16x128xf32>
    %9 = tpu.matmul %6, %8, %cst {dimension_numbers = #tpu.dot_dimension_numbers<[1], [0], [0], [1], [0, 0, 1, 1], [], []>} : vector<16x128xbf16>, vector<128x128xbf16>, vector<16x128xf32> -> vector<16x128xf32>
    %10 = arith.addf %7, %9 : vector<16x128xf32>
    %c0_5 = arith.constant 0 : index
    %c0_6 = arith.constant 0 : index
    %11 = vector.load %arg5[%c0_5, %c0_6] : memref<16x128xf32, #tpu.memory_space<vmem>>, vector<16x128xf32>
    tpu.vector_store %arg5[%c0_5, %c0_6], %10 {strides = array<i32>} : memref<16x128xf32, #tpu.memory_space<vmem>>, vector<16x128xf32>,
    return
  }
  func.func @transform_0(%arg0: i32, %arg1: i32) -> (i32, i32) {
    %c0_i32 = arith.constant 0 : i32
    %c0_i32_0 = arith.constant 0 : i32
    %c0_i32_1 = arith.constant 0 : i32
    return %c0_i32, %c0_i32_0 : i32, i32
  }
  func.func @transform_1(%arg0: i32, %arg1: i32) -> (i32, i32) {
    %c0_i32 = arith.constant 0 : i32
    return %arg1, %arg0 : i32, i32
  }
  func.func @transform_2(%arg0: i32, %arg1: i32) -> (i32, i32) {
    %c0_i32 = arith.constant 0 : i32
    %c0_i32_0 = arith.constant 0 : i32
    return %c0_i32, %arg0 : i32, i32
  }
  func.func @transform_3(%arg0: i32, %arg1: i32) -> (i32, i32) {
    %c0_i32 = arith.constant 0 : i32
    %c0_i32_0 = arith.constant 0 : i32
    return %c0_i32, %arg0 : i32, i32
  }
}

</mosaic_0001>

<llo_original>
// kernel: tpu_custom_call.1
$region0: #{tpu_custom_call.1}
  #allocation0 [shape = 'u32[]', space=smem, size = 0x4, offset = 0x4, fixed_abs, tag = 'smem constant byte address 0x4 - core index']
  #allocation1 [shape = 'u32[144,128]{1,0:T(1,128)}', space=vmem, size = 0x12000, scoped, tag = 'internal scratch']
  %s0 = inlined_call_operand.hbm [shape: bf16[16,128], index: 0, kind: input, shape index: {}]
  %s1 = inlined_call_operand.hbm [shape: bf16[128,128], index: 1, kind: input, shape index: {}]
  %s2 = inlined_call_operand.vmem [shape: f32[1,128], index: 2, kind: input, shape index: {}]
  %s3 = inlined_call_operand.hbm [shape: f32[16,128], index: 3, kind: output, shape index: {}]
  %s4 = sld [smem:[#allocation0]]
  $region34: #{tpu_custom_call.1} parent=0
    _
  %s6 = ssub.s32 1, %s4
  %s7 = scalar_select 0, %s6, %s4
  $region1: #{tpu_custom_call.1} parent=0
    #allocation2 [shape = 'u8[4096]{0}', space=vmem, size = 0x1000, scoped, tag = 'input window, operand 0, single buffered']
    #allocation3 [shape = 's32[1]{0}', space=sflag, size = 0x4, scoped, tag = 'scoped memory for tpu_custom_call.1']
    #allocation4 [shape = 's32[1]{0}', space=sflag, size = 0x4, scoped, tag = 'scoped memory for tpu_custom_call.1']
    #allocation5 [shape = 'u8[32768]{0}', space=vmem, size = 0x8000, scoped, tag = 'input window, operand 1, single buffered']
    #allocation6 [shape = 's32[1]{0}', space=sflag, size = 0x4, scoped, tag = 'scoped memory for tpu_custom_call.1']
    #allocation7 [shape = 'u8[8192]{0}', space=vmem, size = 0x2000, scoped, tag = 'output window, operand 0, single buffered']
    %8 = vsyncpa [#allocation3], 0
    %9 = vsyncpa [#allocation6], 0
    %10 = vsyncpa [#allocation4], 0
    // Predicated region
    $region2: #{tpu_custom_call.1} parent=1 // pred_check
      _
    $region3: #{tpu_custom_call.1} parent=1 // pred_check_branch
      %12 = sbr.rel (0) target = $region5
    $region4: #{tpu_custom_call.1} parent=1 // pred_region
      %s14 = ssub.s32 128, 128
      %15 = vsyncadd [#allocation3], %s14
      %s16 = sshll.u32 [#allocation2], 4
      %s17 = int_to_ptr.vmem [resolvable:$true] %s16
      %22 = dma.hbm_to_vmem [thread:$0]  %s0, 128, %s17, [#allocation3], 64, 64, 4
    $region5: #{tpu_custom_call.1} parent=1 // pred_fallthru
      _
    // Predicated region
    $region6: #{tpu_custom_call.1} parent=1 // pred_check
      _
    $region7: #{tpu_custom_call.1} parent=1 // pred_check_branch
      %24 = sbr.rel (0) target = $region9
    $region8: #{tpu_custom_call.1} parent=1 // pred_region
      %s26 = ssub.s32 1024, 1024
      %27 = vsyncadd [#allocation6], %s26
      %s28 = sshll.u32 [#allocation5], 4
      %s29 = int_to_ptr.vmem [resolvable:$true] %s28
      %34 = dma.hbm_to_vmem [thread:$0]  %s1, 1024, %s29, [#allocation6], 64, 64, 4
    $region9: #{tpu_custom_call.1} parent=1 // pred_fallthru
      _
    // Predicated region
    $region10: #{tpu_custom_call.1} parent=1 // pred_check
      _
    $region11: #{tpu_custom_call.1} parent=1 // pred_check_branch
      %36 = sbr.rel (0) target = $region13
    $region12: #{tpu_custom_call.1} parent=1 // pred_region
      _
    $region13: #{tpu_custom_call.1} parent=1 // pred_fallthru
      _
    // Predicated region
    $region14: #{tpu_custom_call.1} parent=1 // pred_check
      _
    $region15: #{tpu_custom_call.1} parent=1 // pred_check_branch
      %38 = sbr.rel (0) target = $region17
    $region16: #{tpu_custom_call.1} parent=1 // pred_region
      %39 = dma.done [#allocation3], 128
    $region17: #{tpu_custom_call.1} parent=1 // pred_fallthru
      _
    // Predicated region
    $region18: #{tpu_custom_call.1} parent=1 // pred_check
      _
    $region19: #{tpu_custom_call.1} parent=1 // pred_check_branch
      %41 = sbr.rel (0) target = $region21
    $region20: #{tpu_custom_call.1} parent=1 // pred_region
      %42 = dma.done [#allocation6], 1024
    $region21: #{tpu_custom_call.1} parent=1 // pred_fallthru
      _
    %p44 = scmp.eq.s32.totalorder 0, 0
    // Predicated region
    $region22: #{tpu_custom_call.1} parent=1 // pred_check
      %p45 = pneg %p44
    $region23: #{tpu_custom_call.1} parent=1 // pred_check_branch
      %47 = sbr.rel (%p45) target = $region25
    $region24: #{tpu_custom_call.1} parent=1 // pred_region
      %v48 = vld [vmem:[%s2] sm:$0x1]
      %v50 = vlaneseq
      %v51 = vshrl.u32 %v50, 7
      %v52 = vsub.s32 0, %v51
      %v53 = vrot.slane %v48, %v52
      %55 = vst [vmem:[#allocation7] sm:$0xff] %v53
      %56 = vst [vmem:[#allocation7 + $0x8] sm:$0xff] %v53
    $region25: #{tpu_custom_call.1} parent=1 // pred_fallthru
      _
    %s57 = smul.u32 0, 128
    %s58 = sshra.s32 %s57, 7
    %s59 = sand.u32 %s57, 127
    %s60 = smul.addr %s58, 4
    %s61 = scalar_lea.vmem [#allocation2], %s60
    %v62 = vld [vmem:[%s61] sm:$0xf]
    %v63 = vld [vmem:[%s61 + $0x4] sm:$0xf]
    %v64 = vld [vmem:[#allocation7] sm:$0xff]
    %v65 = vld [vmem:[#allocation7 + $0x8] sm:$0xff]
    %v66 = vld [vmem:[#allocation5] sm:$0xf]
    %v67 = vld [vmem:[#allocation5 + $0x4] sm:$0xf]
    %v68 = vld [vmem:[#allocation5 + $0x8] sm:$0xf]
    %v69 = vld [vmem:[#allocation5 + $0xc] sm:$0xf]
    %v70 = vld [vmem:[#allocation5 + $0x10] sm:$0xf]
    %v71 = vld [vmem:[#allocation5 + $0x14] sm:$0xf]
    %v72 = vld [vmem:[#allocation5 + $0x18] sm:$0xf]
    %v73 = vld [vmem:[#allocation5 + $0x1c] sm:$0xf]
    %v74 = vld [vmem:[#allocation5 + $0x20] sm:$0xf]
    %v75 = vld [vmem:[#allocation5 + $0x24] sm:$0xf]
    %v76 = vld [vmem:[#allocation5 + $0x28] sm:$0xf]
    %v77 = vld [vmem:[#allocation5 + $0x2c] sm:$0xf]
    %v78 = vld [vmem:[#allocation5 + $0x30] sm:$0xf]
    %v79 = vld [vmem:[#allocation5 + $0x34] sm:$0xf]
    %v80 = vld [vmem:[#allocation5 + $0x38] sm:$0xf]
    %v81 = vld [vmem:[#allocation5 + $0x3c] sm:$0xf]
    %v84 = vunpack.c.l.b16 %v62
    %v85 = vunpack.c.l.b16 %v63
    %v86 = vpack.c.b16 %v85, %v84
    %v104 = vunpack.c.l.b16 %v66
    %v105 = vunpack.c.l.b16 %v67
    %v106 = vunpack.c.l.b16 %v68
    %v107 = vunpack.c.l.b16 %v69
    %v108 = vunpack.c.l.b16 %v70
    %v109 = vunpack.c.l.b16 %v71
    %v110 = vunpack.c.l.b16 %v72
    %v111 = vunpack.c.l.b16 %v73
    %v112 = vunpack.c.l.b16 %v74
    %v113 = vunpack.c.l.b16 %v75
    %v114 = vunpack.c.l.b16 %v76
    %v115 = vunpack.c.l.b16 %v77
    %v116 = vunpack.c.l.b16 %v78
    %v117 = vunpack.c.l.b16 %v79
    %v118 = vunpack.c.l.b16 %v80
    %v119 = vunpack.c.l.b16 %v81
    %v120 = vpack.c.b16 %v105, %v104
    %v121 = vpack.c.b16 %v107, %v106
    %v122 = vpack.c.b16 %v109, %v108
    %v123 = vpack.c.b16 %v111, %v110
    %v124 = vpack.c.b16 %v113, %v112
    %v125 = vpack.c.b16 %v115, %v114
    %v126 = vpack.c.b16 %v117, %v116
    %v127 = vpack.c.b16 %v119, %v118
    %136 = vmatprep.subr.bf16.mxu0 0
    %137 = vmatpush1.bf16.msra.mxu0 %v120
    %138 = vmatprep.subr.bf16.mxu0 0
    %139 = vmatpush1.bf16.msra.mxu0 %v121
    %140 = vmatprep.subr.bf16.mxu0 0
    %141 = vmatpush1.bf16.msra.mxu0 %v122
    %142 = vmatprep.subr.bf16.mxu0 0
    %143 = vmatpush1.bf16.msra.mxu0 %v123
    %144 = vmatprep.subr.bf16.mxu0 0
    %145 = vmatpush1.bf16.msra.mxu0 %v124
    %146 = vmatprep.subr.bf16.mxu0 0
    %147 = vmatpush1.bf16.msra.mxu0 %v125
    %148 = vmatprep.subr.bf16.mxu0 0
    %149 = vmatpush1.bf16.msra.mxu0 %v126
    %150 = vmatprep.subr.bf16.mxu0 0
    %151 = vmatpush1.bf16.msra.mxu0 %v127
    %152 = vmatprep.subr.bf16.mxu0 0
    %153 = vmatpush1.bf16.msra.mxu0 0
    %154 = vmatprep.subr.bf16.mxu0 0
    %155 = vmatpush1.bf16.msra.mxu0 0
    %156 = vmatprep.subr.bf16.mxu0 0
    %157 = vmatpush1.bf16.msra.mxu0 0
    %158 = vmatprep.subr.bf16.mxu0 0
    %159 = vmatpush1.bf16.msra.mxu0 0
    %160 = vmatprep.subr.bf16.mxu0 0
    %161 = vmatpush1.bf16.msra.mxu0 0
    %162 = vmatprep.subr.bf16.mxu0 0
    %163 = vmatpush1.bf16.msra.mxu0 0
    %164 = vmatprep.subr.bf16.mxu0 0
    %165 = vmatpush1.bf16.msra.mxu0 0
    %166 = vmatprep.subr.bf16.mxu0 0
    %167 = vmatpush1.bf16.msra.mxu0 0
    %168 = vmatprep.mubr.bf16.mxu0 0
    %169 = vmatmul.mubr.bf16.gmra.mrb[0].mxu0 %v86
    %v170 = vpop.f32.mrb[0].mxu0
    %v171 = vadd.f32 0.0, %v170
    %v172 = vpop.f32.mrb[0].mxu0
    %v173 = vpop.f32.mrb[0].mxu0
    %v174 = vadd.f32 0.0, %v173
    %v175 = vpop.f32.mrb[0].mxu0
    %176 = vdwg.mxu0
    %v177 = vadd.f32 %v64, %v171
    %v178 = vadd.f32 %v65, %v174
    %179 = vst [vmem:[#allocation7] sm:$0xff] %v177
    %180 = vst [vmem:[#allocation7 + $0x8] sm:$0xff] %v178
    // Predicated region
    $region26: #{tpu_custom_call.1} parent=1 // pred_check
      _
    $region27: #{tpu_custom_call.1} parent=1 // pred_check_branch
      %182 = sbr.rel (0) target = $region29
    $region28: #{tpu_custom_call.1} parent=1 // pred_region
      %s184 = ssub.s32 256, 256
      %185 = vsyncadd [#allocation4], %s184
      %s186 = sshll.u32 [#allocation7], 4
      %s187 = int_to_ptr.vmem [resolvable:$true] %s186
      %192 = dma.vmem_to_hbm [thread:$0]  %s187, 256, %s3, [#allocation4], 128, 128, 8
    $region29: #{tpu_custom_call.1} parent=1 // pred_fallthru
      _
    // Predicated region
    $region30: #{tpu_custom_call.1} parent=1 // pred_check
      _
    $region31: #{tpu_custom_call.1} parent=1 // pred_check_branch
      %194 = sbr.rel (0) target = $region33
    $region32: #{tpu_custom_call.1} parent=1 // pred_region
      %195 = dma.done [#allocation4], 256
    $region33: #{tpu_custom_call.1} parent=1 // pred_fallthru
      _
    %196 = vsyncpa [#allocation3], 1
    %197 = vsyncpa [#allocation6], 1
    %198 = vsyncpa [#allocation4], 1

</llo_original>
